<compile_context>
chip_gen: v6e
topology: v6e:2x2x1
jax: 0.10.0
libtpu: 0.0.40
codegen_flags: <defaults>
</compile_context>

<pallas_src>
import jax
import jax.numpy as jnp
from jax.experimental import pallas as pl
from jax.experimental.pallas import tpu as pltpu

EPS = 1e-6


def _round_up(v, m):
    return ((v + m - 1) // m) * m


def make_sublayer_connection_kernel(d_orig, d_pad):
    """Fused LayerNorm + Linear(D, D) + residual for (real D, padded D)."""
    pad_count = d_pad - d_orig
    inv_d = 1.0 / d_orig
    inv_dm1 = 1.0 / max(d_orig - 1, 1)   # guard the degenerate D == 1 case

    def kernel(x_ref, w_ref, bias_ref, a2_ref, b2_ref, o_ref):
        # x_ref: (tm, Dp) rows; w_ref: (Dp, Dp); bias/a2/b2: (1, Dp).
        # Padded lanes of x / w / bias / a2 / b2 are all zero.
        x = x_ref[...].astype(jnp.float32)

        # ---- LayerNorm (torch semantics: unbiased std, eps added to std) ----
        # Padded lanes of x are zero, so the raw lane-sum is the true sum.
        mean = jnp.sum(x, axis=-1, keepdims=True) * inv_d
        centered = x - mean
        ssq = jnp.sum(centered * centered, axis=-1, keepdims=True)
        if pad_count:
            # centered on padded lanes is exactly -mean; correct analytically
            # (per-row scalar) instead of an iota/where full-tile mask.
            ssq = ssq - pad_count * (mean * mean)
        std = jnp.sqrt(ssq * inv_dm1)
        # Exact divide path (approx=True would use the EUP vrcp fast path but
        # perturbs numerics at ~1e-4; keep exact to match the f32 reference).
        inv_std = pl.reciprocal(std + EPS, approx=False)
        normed = a2_ref[...] * (centered * inv_std) + b2_ref[...]

        # ---- sublayer: Linear(D, D) on the MXU ----
        # The wrapper controls w_ref's dtype (f32 default, bf16 when the
        # use_bf16_matmul flag is set), so this cast is intentional.
        y = jnp.dot(normed.astype(w_ref.dtype), w_ref[...],
                    preferred_element_type=jnp.float32)
        y = y + bias_ref[...]

        # ---- dropout (eval mode = identity) + residual add ----
        # TODO(synk): training-mode dropout would need pltpu.prng_random_bits
        # and cannot bit-match torch's RNG.
        # Rows beyond M in a ragged last block compute garbage here; their
        # output writes are masked by Pallas, so this never reaches HBM.
        o_ref[...] = (x + y).astype(o_ref.dtype)

    return kernel


def _vmem_budget():
    """Per-generation (vmem_limit_bytes, default row tile, min grid steps)."""
    vmem_cap = None
    try:
        info = pltpu.get_tpu_info()
        vmem_cap = int(getattr(info, "vmem_capacity_bytes", 0)) or None
    except Exception:
        vmem_cap = None
    if vmem_cap is not None and vmem_cap >= 96 * 1024 * 1024:
        # v5e / v6e: 128 MiB physical VMEM, single TensorCore.
        return 96 * 1024 * 1024, 512, 1
    if vmem_cap is not None:
        # v7x-class: 64 MiB physical VMEM, 2 TensorCores -> want >= 4 steps
        # total so each core gets a couple of steps to pipeline DMAs.
        return 48 * 1024 * 1024, 256, 4
    # Unknown backend: conservative defaults, safe on all generations.
    return 40 * 1024 * 1024, 256, 2


def sublayer_connection(x, w, bias, a2, b2, *, tm=None, use_bf16_matmul=False):
    """x: (B, S, D); w: (D, D); bias/a2/b2: (D,)."""
    B, S, D = x.shape
    M = B * S

    vmem_limit, tm_default, min_steps = _vmem_budget()
    if tm is None:
        tm = tm_default

    # Lane pad only when D is not already a multiple of 128 (keeps the output
    # block lane-dense / unmasked vst). Rows are NOT padded: the grid uses
    # pl.cdiv and Pallas masks the ragged last block.
    Dp = D if D % 128 == 0 else _round_up(max(D, 128), 128)

    mm_dtype = jnp.bfloat16 if use_bf16_matmul else jnp.float32

    # VMEM-derived row-tile cap: x tile (2 bufs) + out tile (2 bufs) +
    # ~5 full-tile f32 intermediates ~= 40*Dp bytes per row, plus the
    # single-buffered (Dp, Dp) weight.
    weight_bytes = Dp * Dp * (2 if use_bf16_matmul else 4)
    avail = int(0.85 * vmem_limit) - weight_bytes
    tm_vmem = max(8, (avail // (40 * Dp)) // 8 * 8) if avail > 0 else 8
    tm_eff = min(tm, tm_vmem)
    if min_steps > 1:
        # Megacore (v7x): ensure a few grid steps when M allows.
        tm_eff = min(tm_eff,
                     max(8, _round_up((M + min_steps - 1) // min_steps, 8)))
    if tm_eff >= M:
        tm_eff = M                      # single full-extent block (always legal)
    else:
        tm_eff = max(8, (tm_eff // 8) * 8)

    x2 = x.reshape(M, D)
    if Dp != D:
        x2 = jnp.pad(x2, ((0, 0), (0, Dp - D)))
        w_p = jnp.pad(w, ((0, Dp - D), (0, Dp - D)))
    else:
        w_p = w
    w_p = w_p.astype(mm_dtype)

    def pad_vec(v):
        v2 = v.reshape(1, D).astype(jnp.float32)
        return v2 if Dp == D else jnp.pad(v2, ((0, 0), (0, Dp - D)))

    bias2, a2_2, b2_2 = pad_vec(bias), pad_vec(a2), pad_vec(b2)

    const = lambda i: (0, 0)

    out = pl.pallas_call(
        make_sublayer_connection_kernel(D, Dp),
        out_shape=jax.ShapeDtypeStruct((M, Dp), x.dtype),
        grid_spec=pltpu.PrefetchScalarGridSpec(
            num_scalar_prefetch=0,
            grid=(pl.cdiv(M, tm_eff),),
            in_specs=[
                pl.BlockSpec((tm_eff, Dp), lambda i: (i, 0)),   # x rows (streamed)
                # Constant blocks: single-buffer (no re-DMA across steps, and
                # Buffered(1) halves their VMEM vs default double-buffering).
                pl.BlockSpec((Dp, Dp), const, pipeline_mode=pl.Buffered(1)),  # weight
                pl.BlockSpec((1, Dp), const, pipeline_mode=pl.Buffered(1)),   # bias
                pl.BlockSpec((1, Dp), const, pipeline_mode=pl.Buffered(1)),   # a_2
                pl.BlockSpec((1, Dp), const, pipeline_mode=pl.Buffered(1)),   # b_2
            ],
            out_specs=pl.BlockSpec((tm_eff, Dp), lambda i: (i, 0)),
        ),
        compiler_params=pltpu.CompilerParams(
            dimension_semantics=("parallel",),
            vmem_limit_bytes=vmem_limit,
        ),
    )(x2, w_p, bias2, a2_2, b2_2)

    if Dp != D:
        out = out[:, :D]
    return out.reshape(B, S, D)


def reference(x, w, bias, a2, b2):
    """Pure-JAX reference mirroring the PyTorch forward (eval-mode dropout)."""
    x32 = x.astype(jnp.float32)
    mean = jnp.mean(x32, axis=-1, keepdims=True)
    centered = x32 - mean
    var = jnp.sum(centered * centered, axis=-1, keepdims=True) / (x.shape[-1] - 1)
    std = jnp.sqrt(var)
    normed = a2 * centered / (std + EPS) + b2
    y = normed @ w + bias
    return (x32 + y).astype(x.dtype)


if __name__ == "__main__":
    B, S, D = 2, 8, 32
    key = jax.random.PRNGKey(0)
    kx, kw, kb = jax.random.split(key, 3)

    x = jax.random.normal(kx, (B, S, D), dtype=jnp.float32)
    # Deterministic sublayer (Linear) parameters.
    w = jax.random.normal(kw, (D, D), dtype=jnp.float32) * (1.0 / jnp.sqrt(D))
    bias = jax.random.normal(kb, (D,), dtype=jnp.float32) * 0.01
    # LayerNorm parameters per the module __init__: ones / zeros.
    a2 = jnp.ones((D,), dtype=jnp.float32)
    b2 = jnp.zeros((D,), dtype=jnp.float32)

    out = sublayer_connection(x, w, bias, a2, b2)
    out = jax.block_until_ready(out)

    ref = reference(x, w, bias, a2, b2)
    assert out.shape == (B, S, D)
    assert jnp.allclose(out, ref, atol=1e-4, rtol=1e-4), "mismatch vs reference"

    print("KERNEL_OK")
</pallas_src>

<mosaic_0001>
module attributes {stable_mosaic.version = 11 : i64} {
  func.func @kernel(%arg0: i32, %arg1: memref<8x128xf32, #tpu.memory_space<vmem>>, %arg2: memref<128x128xf32, #tpu.memory_space<vmem>>, %arg3: memref<1x128xf32, #tpu.memory_space<vmem>>, %arg4: memref<1x128xf32, #tpu.memory_space<vmem>>, %arg5: memref<1x128xf32, #tpu.memory_space<vmem>>, %arg6: memref<8x128xf32, #tpu.memory_space<vmem>>) attributes {dimension_semantics = [#tpu.dimension_semantics<parallel>], iteration_bounds = array<i64: 2>, scalar_prefetch = 0 : i64, scratch_operands = 0 : i64, tpu.core_type = #tpu.core_type<tc>, window_params = [{transform_indices = @transform_0, window_bounds = array<i64: 8, 128>}, {pipeline_mode = #tpu.pipeline_mode<synchronous>, transform_indices = @transform_1, window_bounds = array<i64: 128, 128>}, {pipeline_mode = #tpu.pipeline_mode<synchronous>, transform_indices = @transform_2, window_bounds = array<i64: 1, 128>}, {pipeline_mode = #tpu.pipeline_mode<synchronous>, transform_indices = @transform_3, window_bounds = array<i64: 1, 128>}, {pipeline_mode = #tpu.pipeline_mode<synchronous>, transform_indices = @transform_4, window_bounds = array<i64: 1, 128>}, {transform_indices = @transform_5, window_bounds = array<i64: 8, 128>}]} {
    %c0 = arith.constant 0 : index
    %c0_0 = arith.constant 0 : index
    %0 = vector.load %arg1[%c0, %c0_0] : memref<8x128xf32, #tpu.memory_space<vmem>>, vector<8x128xf32>
    %cst = arith.constant dense<0.000000e+00> : vector<8xf32>
    %1 = vector.multi_reduction <add>, %0, %cst [1] : vector<8x128xf32> to vector<8xf32>
    %2 = vector.shape_cast %1 : vector<8xf32> to vector<8x1xf32>
    %cst_1 = arith.constant 3.125000e-02 : f32
    %3 = vector.broadcast %cst_1 : f32 to vector<8x1xf32>
    %4 = arith.mulf %2, %3 : vector<8x1xf32>
    %5 = vector.broadcast %4 : vector<8x1xf32> to vector<8x128xf32>
    %6 = arith.subf %0, %5 : vector<8x128xf32>
    %7 = arith.mulf %6, %6 : vector<8x128xf32>
    %cst_2 = arith.constant dense<0.000000e+00> : vector<8xf32>
    %8 = vector.multi_reduction <add>, %7, %cst_2 [1] : vector<8x128xf32> to vector<8xf32>
    %9 = vector.shape_cast %8 : vector<8xf32> to vector<8x1xf32>
    %10 = arith.mulf %4, %4 : vector<8x1xf32>
    %cst_3 = arith.constant 9.600000e+01 : f32
    %11 = vector.broadcast %cst_3 : f32 to vector<8x1xf32>
    %12 = arith.mulf %11, %10 : vector<8x1xf32>
    %13 = arith.subf %9, %12 : vector<8x1xf32>
    %cst_4 = arith.constant 0.0322580636 : f32
    %14 = vector.broadcast %cst_4 : f32 to vector<8x1xf32>
    %15 = arith.mulf %13, %14 : vector<8x1xf32>
    %16 = math.sqrt %15 : vector<8x1xf32>
    %cst_5 = arith.constant 9.99999997E-7 : f32
    %17 = vector.broadcast %cst_5 : f32 to vector<8x1xf32>
    %18 = arith.addf %16, %17 : vector<8x1xf32>
    %19 = tpu.reciprocal %18 : vector<8x1xf32> -> vector<8x1xf32>
    %c0_6 = arith.constant 0 : index
    %c0_7 = arith.constant 0 : index
    %20 = vector.load %arg4[%c0_6, %c0_7] : memref<1x128xf32, #tpu.memory_space<vmem>>, vector<1x128xf32>
    %21 = vector.broadcast %19 : vector<8x1xf32> to vector<8x128xf32>
    %22 = arith.mulf %6, %21 : vector<8x128xf32>
    %23 = vector.broadcast %20 : vector<1x128xf32> to vector<8x128xf32>
    %24 = arith.mulf %23, %22 : vector<8x128xf32>
    %c0_8 = arith.constant 0 : index
    %c0_9 = arith.constant 0 : index
    %25 = vector.load %arg5[%c0_8, %c0_9] : memref<1x128xf32, #tpu.memory_space<vmem>>, vector<1x128xf32>
    %26 = vector.broadcast %25 : vector<1x128xf32> to vector<8x128xf32>
    %27 = arith.addf %24, %26 : vector<8x128xf32>
    %c0_10 = arith.constant 0 : index
    %c0_11 = arith.constant 0 : index
    %28 = vector.load %arg2[%c0_10, %c0_11] : memref<128x128xf32, #tpu.memory_space<vmem>>, vector<128x128xf32>
    %cst_12 = arith.constant dense<0.000000e+00> : vector<8x128xf32>
    %29 = tpu.matmul %27, %28, %cst_12 {dimension_numbers = #tpu.dot_dimension_numbers<[1], [0], [0], [1], [0, 0, 1, 1], [], []>} : vector<8x128xf32>, vector<128x128xf32>, vector<8x128xf32> -> vector<8x128xf32>
    %c0_13 = arith.constant 0 : index
    %c0_14 = arith.constant 0 : index
    %30 = vector.load %arg3[%c0_13, %c0_14] : memref<1x128xf32, #tpu.memory_space<vmem>>, vector<1x128xf32>
    %31 = vector.broadcast %30 : vector<1x128xf32> to vector<8x128xf32>
    %32 = arith.addf %29, %31 : vector<8x128xf32>
    %33 = arith.addf %0, %32 : vector<8x128xf32>
    %c0_15 = arith.constant 0 : index
    %c0_16 = arith.constant 0 : index
    %34 = vector.load %arg6[%c0_15, %c0_16] : memref<8x128xf32, #tpu.memory_space<vmem>>, vector<8x128xf32>
    tpu.vector_store %arg6[%c0_15, %c0_16], %33 {strides = array<i32>} : memref<8x128xf32, #tpu.memory_space<vmem>>, vector<8x128xf32>,
    return
  }
  func.func @transform_0(%arg0: i32) -> (i32, i32) {
    %c0_i32 = arith.constant 0 : i32
    %c0_i32_0 = arith.constant 0 : i32
    return %arg0, %c0_i32 : i32, i32
  }
  func.func @transform_1(%arg0: i32) -> (i32, i32) {
    %c0_i32 = arith.constant 0 : i32
    %c0_i32_0 = arith.constant 0 : i32
    %c0_i32_1 = arith.constant 0 : i32
    return %c0_i32, %c0_i32_0 : i32, i32
  }
  func.func @transform_2(%arg0: i32) -> (i32, i32) {
    %c0_i32 = arith.constant 0 : i32
    %c0_i32_0 = arith.constant 0 : i32
    %c0_i32_1 = arith.constant 0 : i32
    return %c0_i32, %c0_i32_0 : i32, i32
  }
  func.func @transform_3(%arg0: i32) -> (i32, i32) {
    %c0_i32 = arith.constant 0 : i32
    %c0_i32_0 = arith.constant 0 : i32
    %c0_i32_1 = arith.constant 0 : i32
    return %c0_i32, %c0_i32_0 : i32, i32
  }
  func.func @transform_4(%arg0: i32) -> (i32, i32) {
    %c0_i32 = arith.constant 0 : i32
    %c0_i32_0 = arith.constant 0 : i32
    %c0_i32_1 = arith.constant 0 : i32
    return %c0_i32, %c0_i32_0 : i32, i32
  }
  func.func @transform_5(%arg0: i32) -> (i32, i32) {
    %c0_i32 = arith.constant 0 : i32
    %c0_i32_0 = arith.constant 0 : i32
    return %arg0, %c0_i32 : i32, i32
  }
}

</mosaic_0001>

<llo_original>
// kernel: tpu_custom_call.1
$region0: #{tpu_custom_call.1}
  #allocation0 [shape = 'u32[]', space=smem, size = 0x4, offset = 0x4, fixed_abs, tag = 'smem constant byte address 0x4 - core index']
  #allocation1 [shape = 'u32[144,128]{1,0:T(1,128)}', space=vmem, size = 0x12000, scoped, tag = 'internal scratch']
  %s0 = inlined_call_operand.hbm [shape: f32[16,128], index: 0, kind: input, shape index: {}]
  %s1 = inlined_call_operand.hbm [shape: f32[128,128], index: 1, kind: input, shape index: {}]
  %s2 = inlined_call_operand.vmem [shape: f32[1,128], index: 2, kind: input, shape index: {}]
  %s3 = inlined_call_operand.vmem [shape: f32[1,128], index: 3, kind: input, shape index: {}]
  %s4 = inlined_call_operand.vmem [shape: f32[1,128], index: 4, kind: input, shape index: {}]
  %s5 = inlined_call_operand.hbm [shape: f32[16,128], index: 5, kind: output, shape index: {}]
  %s6 = sld [smem:[#allocation0]]
  $region61: #{tpu_custom_call.1} parent=0
    _
  %s8 = ssub.s32 1, %s6
  %s9 = scalar_select 0, %s8, %s6
  $region1: #{tpu_custom_call.1} parent=0
    #allocation2 [shape = 'u8[8192]{0}', space=vmem, size = 0x2000, scoped, tag = 'input window, operand 0']
    #allocation3 [shape = 's32[2]{0}', space=sflag, size = 0x8, scoped, tag = 'scoped memory for tpu_custom_call.1']
    #allocation4 [shape = 's32[2]{0}', space=sflag, size = 0x8, scoped, tag = 'scoped memory for tpu_custom_call.1']
    #allocation5 [shape = 'u8[65536]{0}', space=vmem, size = 0x10000, scoped, tag = 'input window, operand 1, single buffered']
    #allocation6 [shape = 's32[1]{0}', space=sflag, size = 0x4, scoped, tag = 'scoped memory for tpu_custom_call.1']
    #allocation7 [shape = 'u8[8192]{0}', space=vmem, size = 0x2000, scoped, tag = 'output window, operand 0']
    %10 = vsyncpa [#allocation3], 0
    %s11 = scalar_lea.sflag [#allocation3], 1
    %12 = vsyncpa %s11, 0
    %13 = vsyncpa [#allocation6], 0
    %14 = vsyncpa [#allocation4], 0
    %s15 = scalar_lea.sflag [#allocation4], 1
    %16 = vsyncpa %s15, 0
    loop: start=0, step=1, limit=4
    $region2: #{tpu_custom_call.1} parent=1 // loop_pre_header
      _
    $region3: #{tpu_custom_call.1} parent=1 // loop_header
      %s18 = sphi 0, %s22
      %p19 = scmp.ge.s32.totalorder %s18, 4
      %s28 = sphi 0, %s30
      %s31 = sphi 0, %s28
      %s32 = sphi 0, %s31
      %s48 = sphi 0, %s32
      %s52 = sphi 0, %s52
      %s54 = sphi 0, %s52
      %s55 = sphi 0, %s54
      %s69 = sphi 0, %s55
      %s73 = sphi 0, %s73
      %s75 = sphi 0, %s73
      %s76 = sphi 0, %s75
      %s90 = sphi 0, %s76
      %s94 = sphi 0, %s94
      %s96 = sphi 0, %s94
      %s97 = sphi 0, %s96
      %s111 = sphi 0, %s97
      %s115 = sphi 0, %s115
      %s117 = sphi 0, %s115
      %s118 = sphi 0, %s117
      %s132 = sphi 0, %s118
      %s138 = sphi 0, %s140
      %s141 = sphi 0, %s138
      %s142 = sphi 0, %s141
      %s158 = sphi 0, %s142
    $region4: #{tpu_custom_call.1} parent=1 // loop_header_branch
      %21 = sbr.rel (%p19) target = $region8
    $region5: #{tpu_custom_call.1} parent=1 // loop_body
      %s23 = ssub.s32 %s18, 1
      %s24 = ssub.s32 %s18, 2
      %s25 = sadd.s32 %s18, 1
      %s26 = ssub.s32 %s18, %s25
      %p27 = scmp.eq.s32.totalorder %s26, 0
      %s29 = sadd.s32 %s28, 1
      %s30 = scalar_select %p27, %s28, %s29
      %p33 = pneg %p27
      %p34 = scmp.eq.s32.totalorder %s18, 1
      %p35 = por %p33, %p34
      %p36 = scmp.ne.s32.totalorder %s28, %s31
      %p37 = scmp.eq.s32.totalorder %s18, 0
      %p38 = por %p36, %p37
      %p39 = scmp.ne.s32.totalorder %s28, %s31
      %p40 = scmp.eq.s32.totalorder %s23, 1
      %p41 = por %p39, %p40
      %p42 = scmp.ne.s32.totalorder %s31, %s32
      %p43 = scmp.eq.s32.totalorder %s23, 0
      %p44 = por %p42, %p43
      %p45 = scmp.ne.s32.totalorder %s31, %s32
      %p46 = scmp.eq.s32.totalorder %s24, 1
      %p47 = por %p45, %p46
      %p49 = scmp.ne.s32.totalorder %s32, %s48
      %p50 = scmp.eq.s32.totalorder %s24, 0
      %p51 = por %p49, %p50
      %s53 = sadd.s32 %s52, 1
      %p56 = scmp.eq.s32.totalorder %s18, 1
      %p57 = scmp.ne.s32.totalorder %s52, %s54
      %p58 = scmp.eq.s32.totalorder %s18, 0
      %p59 = por %p57, %p58
      %p60 = scmp.ne.s32.totalorder %s52, %s54
      %p61 = scmp.eq.s32.totalorder %s23, 1
      %p62 = por %p60, %p61
      %p63 = scmp.ne.s32.totalorder %s54, %s55
      %p64 = scmp.eq.s32.totalorder %s23, 0
      %p65 = por %p63, %p64
      %p66 = scmp.ne.s32.totalorder %s54, %s55
      %p67 = scmp.eq.s32.totalorder %s24, 1
      %p68 = por %p66, %p67
      %p70 = scmp.ne.s32.totalorder %s55, %s69
      %p71 = scmp.eq.s32.totalorder %s24, 0
      %p72 = por %p70, %p71
      %s74 = sadd.s32 %s73, 1
      %p77 = scmp.eq.s32.totalorder %s18, 1
      %p78 = scmp.ne.s32.totalorder %s73, %s75
      %p79 = scmp.eq.s32.totalorder %s18, 0
      %p80 = por %p78, %p79
      %p81 = scmp.ne.s32.totalorder %s73, %s75
      %p82 = scmp.eq.s32.totalorder %s23, 1
      %p83 = por %p81, %p82
      %p84 = scmp.ne.s32.totalorder %s75, %s76
      %p85 = scmp.eq.s32.totalorder %s23, 0
      %p86 = por %p84, %p85
      %p87 = scmp.ne.s32.totalorder %s75, %s76
      %p88 = scmp.eq.s32.totalorder %s24, 1
      %p89 = por %p87, %p88
      %p91 = scmp.ne.s32.totalorder %s76, %s90
      %p92 = scmp.eq.s32.totalorder %s24, 0
      %p93 = por %p91, %p92
      %s95 = sadd.s32 %s94, 1
      %p98 = scmp.eq.s32.totalorder %s18, 1
      %p99 = scmp.ne.s32.totalorder %s94, %s96
      %p100 = scmp.eq.s32.totalorder %s18, 0
      %p101 = por %p99, %p100
      %p102 = scmp.ne.s32.totalorder %s94, %s96
      %p103 = scmp.eq.s32.totalorder %s23, 1
      %p104 = por %p102, %p103
      %p105 = scmp.ne.s32.totalorder %s96, %s97
      %p106 = scmp.eq.s32.totalorder %s23, 0
      %p107 = por %p105, %p106
      %p108 = scmp.ne.s32.totalorder %s96, %s97
      %p109 = scmp.eq.s32.totalorder %s24, 1
      %p110 = por %p108, %p109
      %p112 = scmp.ne.s32.totalorder %s97, %s111
      %p113 = scmp.eq.s32.totalorder %s24, 0
      %p114 = por %p112, %p113
      %s116 = sadd.s32 %s115, 1
      %p119 = scmp.eq.s32.totalorder %s18, 1
      %p120 = scmp.ne.s32.totalorder %s115, %s117
      %p121 = scmp.eq.s32.totalorder %s18, 0
      %p122 = por %p120, %p121
      %p123 = scmp.ne.s32.totalorder %s115, %s117
      %p124 = scmp.eq.s32.totalorder %s23, 1
      %p125 = por %p123, %p124
      %p126 = scmp.ne.s32.totalorder %s117, %s118
      %p127 = scmp.eq.s32.totalorder %s23, 0
      %p128 = por %p126, %p127
      %p129 = scmp.ne.s32.totalorder %s117, %s118
      %p130 = scmp.eq.s32.totalorder %s24, 1
      %p131 = por %p129, %p130
      %p133 = scmp.ne.s32.totalorder %s118, %s132
      %p134 = scmp.eq.s32.totalorder %s24, 0
      %p135 = por %p133, %p134
      %s136 = ssub.s32 %s18, %s25
      %p137 = scmp.eq.s32.totalorder %s136, 0
      %s139 = sadd.s32 %s138, 1
      %s140 = scalar_select %p137, %s138, %s139
      %p143 = pneg %p137
      %p144 = scmp.eq.s32.totalorder %s18, 1
      %p145 = por %p143, %p144
      %p146 = scmp.ne.s32.totalorder %s138, %s141
      %p147 = scmp.eq.s32.totalorder %s18, 0
      %p148 = por %p146, %p147
      %p149 = scmp.ne.s32.totalorder %s138, %s141
      %p150 = scmp.eq.s32.totalorder %s23, 1
      %p151 = por %p149, %p150
      %p152 = scmp.ne.s32.totalorder %s141, %s142
      %p153 = scmp.eq.s32.totalorder %s23, 0
      %p154 = por %p152, %p153
      %p155 = scmp.ne.s32.totalorder %s141, %s142
      %p156 = scmp.eq.s32.totalorder %s24, 1
      %p157 = por %p155, %p156
      %p159 = scmp.ne.s32.totalorder %s142, %s158
      %p160 = scmp.eq.s32.totalorder %s24, 0
      %p161 = por %p159, %p160
      %p162 = scmp.le.s32.totalorder 1, %s18
      %p163 = scmp.lt.s32.totalorder %s18, 3
      %p164 = pnand %p162, %p163
      %p165 = pneg %p164
      // Predicated region
      $region9: #{tpu_custom_call.1} parent=5 // pred_check
        _
      $region10: #{tpu_custom_call.1} parent=5 // pred_check_branch
        %167 = sbr.rel (%p164) target = $region12
      $region11: #{tpu_custom_call.1} parent=5 // pred_region
        %s168 = ssub.s32 %s18, 1
        // Predicated region
        $region13: #{tpu_custom_call.1} parent=11 // pred_check
          %p169 = pneg %p65
        $region14: #{tpu_custom_call.1} parent=11 // pred_check_branch
          %171 = sbr.rel (%p169) target = $region16
        $region15: #{tpu_custom_call.1} parent=11 // pred_region
          %s173 = ssub.s32 2048, 2048
          %174 = vsyncadd [#allocation6], %s173
          %s175 = sshll.u32 [#allocation5], 4
          %s176 = int_to_ptr.vmem [resolvable:$true] %s175
          %181 = dma.hbm_to_vmem [thread:$0]  %s1, 2048, %s176, [#allocation6], 128, 128, 8
        $region16: #{tpu_custom_call.1} parent=11 // pred_fallthru
          _
        // Predicated region
        $region17: #{tpu_custom_call.1} parent=11 // pred_check
          %p182 = pneg %p86
        $region18: #{tpu_custom_call.1} parent=11 // pred_check_branch
          %184 = sbr.rel (%p182) target = $region20
        $region19: #{tpu_custom_call.1} parent=11 // pred_region
          _
        $region20: #{tpu_custom_call.1} parent=11 // pred_fallthru
          _
        // Predicated region
        $region21: #{tpu_custom_call.1} parent=11 // pred_check
          %p185 = pneg %p107
        $region22: #{tpu_custom_call.1} parent=11 // pred_check_branch
          %187 = sbr.rel (%p185) target = $region24
        $region23: #{tpu_custom_call.1} parent=11 // pred_region
          _
        $region24: #{tpu_custom_call.1} parent=11 // pred_fallthru
          _
        // Predicated region
        $region25: #{tpu_custom_call.1} parent=11 // pred_check
          %p188 = pneg %p128
        $region26: #{tpu_custom_call.1} parent=11 // pred_check_branch
          %190 = sbr.rel (%p188) target = $region28
        $region27: #{tpu_custom_call.1} parent=11 // pred_region
          _
        $region28: #{tpu_custom_call.1} parent=11 // pred_fallthru
          _
      $region12: #{tpu_custom_call.1} parent=5 // pred_fallthru
        _
      %p191 = scmp.lt.s32.totalorder %s18, 2
      // Predicated region
      $region29: #{tpu_custom_call.1} parent=5 // pred_check
        %p192 = pneg %p191
      $region30: #{tpu_custom_call.1} parent=5 // pred_check_branch
        %194 = sbr.rel (%p192) target = $region32
      $region31: #{tpu_custom_call.1} parent=5 // pred_region
        // Predicated region
        $region33: #{tpu_custom_call.1} parent=31 // pred_check
          %p195 = pneg %p38
        $region34: #{tpu_custom_call.1} parent=31 // pred_check_branch
          %197 = sbr.rel (%p195) target = $region36
        $region35: #{tpu_custom_call.1} parent=31 // pred_region
          %s198 = sand.u32 %s28, 1
          %s199 = scalar_lea.sflag [#allocation3], %s198
          %s200 = sand.u32 %s28, 1
          %s201 = smul.addr %s200, 8
          %s202 = scalar_lea.vmem [#allocation2], %s201
          %s204 = ssub.s32 128, 128
          %205 = vsyncadd %s199, %s204
          %s206 = smul.addr %s18, 128
          %s207 = scalar_lea.hbm %s0, %s206
          %s209 = sshll.u32 %s202, 4
          %s210 = int_to_ptr.vmem [resolvable:$true] %s209
          %212 = dma.hbm_to_vmem [thread:$0]  %s207, 128, %s210, %s199
        $region36: #{tpu_custom_call.1} parent=31 // pred_fallthru
          _
      $region32: #{tpu_custom_call.1} parent=5 // pred_fallthru
        _
      %p213 = scmp.le.s32.totalorder 1, %s18
      %p214 = scmp.lt.s32.totalorder %s18, 3
      %p215 = pnand %p213, %p214
      %p216 = pneg %p215
      // Predicated region
      $region37: #{tpu_custom_call.1} parent=5 // pred_check
        _
      $region38: #{tpu_custom_call.1} parent=5 // pred_check_branch
        %218 = sbr.rel (%p215) target = $region40
      $region39: #{tpu_custom_call.1} parent=5 // pred_region
        %s219 = ssub.s32 %s18, 1
        %s220 = sand.u32 %s31, 1
        %s221 = scalar_lea.sflag [#allocation3], %s220
        %s222 = sand.u32 %s31, 1
        %s223 = smul.addr %s222, 8
        %s224 = scalar_lea.vmem [#allocation2], %s223
        // Predicated region
        $region41: #{tpu_custom_call.1} parent=39 // pred_check
          %p225 = pneg %p44
        $region42: #{tpu_custom_call.1} parent=39 // pred_check_branch
          %227 = sbr.rel (%p225) target = $region44
        $region43: #{tpu_custom_call.1} parent=39 // pred_region
          %228 = dma.done %s221, 128
        $region44: #{tpu_custom_call.1} parent=39 // pred_fallthru
          _
        // Predicated region
        $region45: #{tpu_custom_call.1} parent=39 // pred_check
          %p229 = pneg %p65
        $region46: #{tpu_custom_call.1} parent=39 // pred_check_branch
          %231 = sbr.rel (%p229) target = $region48
        $region47: #{tpu_custom_call.1} parent=39 // pred_region
          %232 = dma.done [#allocation6], 2048
        $region48: #{tpu_custom_call.1} parent=39 // pred_fallthru
          _
        %s233 = sand.u32 %s31, 1
        %s234 = scalar_lea.sflag [#allocation3], %s233
        %s235 = sand.u32 %s31, 1
        %s236 = smul.addr %s235, 8
        %s237 = scalar_lea.vmem [#allocation2], %s236
        %p238 = pneg %p44
        %p239 = pneg %p41
        %p240 = pneg %p65
        %p241 = pneg %p62
        %p242 = pneg %p86
        %p243 = pneg %p83
        %p244 = pneg %p107
        %p245 = pneg %p104
        %p246 = pneg %p128
        %p247 = pneg %p125
        %p248 = pneg %p154
        %p249 = pneg %p151
        %s250 = sand.u32 %s141, 1
        %s251 = scalar_lea.sflag [#allocation4], %s250
        %s252 = sand.u32 %s141, 1
        %s253 = smul.addr %s252, 8
        %s254 = scalar_lea.vmem [#allocation7], %s253
        %v255 = vld [vmem:[%s224] sm:$0xff]
        %256 = vadd.xlane.f32.xlu0 %v255
        %v257 = vpop.xlane.xlu0 %256
        %v258 = vmul.f32 %v257, 0.03125
        %v259 = vsub.f32 %v255, %v258
        %v260 = vmul.f32 %v259, %v259
        %261 = vadd.xlane.f32.xlu0 %v260
        %v262 = vpop.xlane.xlu0 %261
        %v263 = vmul.f32 %v258, %v258
        %v264 = vmul.f32 %v263, 96.0
        %v265 = vsub.f32 %v262, %v264
        %v266 = vmul.f32 %v265, 0.032258064
        %v267 = vrsqrt.pop %v266
        %v268 = vmul.f32 %v266, %v267
        %vm269 = vcmp.eq.f32.partialorder %v266, inf
        %v270 = vsel %vm269, %v266, %v268
        %vm271 = vcmp.eq.f32.partialorder %v266, 0.0
        %v272 = vand.u32 %v266, 2147483648
        %v273 = vsel %vm271, %v272, %v270
        %v274 = vadd.f32 %v273, 1e-06
        %v275 = vrcp.pop %v274
        %v276 = vld [vmem:[%s3] sm:$0x1]
        %v277 = vmul.f32 %v259, %v275
        %v279 = vlaneseq
        %v280 = vshrl.u32 %v279, 7
        %v281 = vsub.s32 0, %v280
        %v282 = vrot.slane %v276, %v281
        %v284 = vmul.f32 %v282, %v277
        %v285 = vld [vmem:[%s4] sm:$0x1]
        %v287 = vlaneseq
        %v288 = vshrl.u32 %v287, 7
        %v289 = vsub.s32 0, %v288
        %v290 = vrot.slane %v285, %v289
        %v292 = vadd.f32 %v284, %v290
        %v293 = vld [vmem:[#allocation5] sm:$0xff]
        %v294 = vld [vmem:[#allocation5 + $0x8] sm:$0xff]
        %v295 = vld [vmem:[#allocation5 + $0x10] sm:$0xff]
        %v296 = vld [vmem:[#allocation5 + $0x18] sm:$0xff]
        %v297 = vld [vmem:[#allocation5 + $0x20] sm:$0xff]
        %v298 = vld [vmem:[#allocation5 + $0x28] sm:$0xff]
        %v299 = vld [vmem:[#allocation5 + $0x30] sm:$0xff]
        %v300 = vld [vmem:[#allocation5 + $0x38] sm:$0xff]
        %v301 = vld [vmem:[#allocation5 + $0x40] sm:$0xff]
        %v302 = vld [vmem:[#allocation5 + $0x48] sm:$0xff]
        %v303 = vld [vmem:[#allocation5 + $0x50] sm:$0xff]
        %v304 = vld [vmem:[#allocation5 + $0x58] sm:$0xff]
        %v305 = vld [vmem:[#allocation5 + $0x60] sm:$0xff]
        %v306 = vld [vmem:[#allocation5 + $0x68] sm:$0xff]
        %v307 = vld [vmem:[#allocation5 + $0x70] sm:$0xff]
        %v308 = vld [vmem:[#allocation5 + $0x78] sm:$0xff]
        %v309 = vld [vmem:[%s2] sm:$0x1]
        %v311 = vlaneseq
        %v312 = vshrl.u32 %v311, 7
        %v313 = vsub.s32 0, %v312
        %v314 = vrot.slane %v309, %v313
        %316 = vmatprep.subr.mxu0 0.0
        %317 = vmatpush1.msra.mxu0 %v308
        %318 = vmatprep.subr.mxu0 0.0
        %319 = vmatpush1.msra.mxu0 %v307
        %320 = vmatprep.subr.mxu0 0.0
        %321 = vmatpush1.msra.mxu0 %v306
        %322 = vmatprep.subr.mxu0 0.0
        %323 = vmatpush1.msra.mxu0 %v305
        %324 = vmatprep.subr.mxu0 0.0
        %325 = vmatpush1.msra.mxu0 %v304
        %326 = vmatprep.subr.mxu0 0.0
        %327 = vmatpush1.msra.mxu0 %v303
        %328 = vmatprep.subr.mxu0 0.0
        %329 = vmatpush1.msra.mxu0 %v302
        %330 = vmatprep.subr.mxu0 0.0
        %331 = vmatpush1.msra.mxu0 %v301
        %332 = vmatprep.subr.mxu0 0.0
        %333 = vmatpush1.msra.mxu0 %v300
        %334 = vmatprep.subr.mxu0 0.0
        %335 = vmatpush1.msra.mxu0 %v299
        %336 = vmatprep.subr.mxu0 0.0
        %337 = vmatpush1.msra.mxu0 %v298
        %338 = vmatprep.subr.mxu0 0.0
        %339 = vmatpush1.msra.mxu0 %v297
        %340 = vmatprep.subr.mxu0 0.0
        %341 = vmatpush1.msra.mxu0 %v296
        %342 = vmatprep.subr.mxu0 0.0
        %343 = vmatpush1.msra.mxu0 %v295
        %344 = vmatprep.subr.mxu0 0.0
        %345 = vmatpush1.msra.mxu0 %v294
        %346 = vmatprep.subr.mxu0 0.0
        %347 = vmatpush1.msra.mxu0 %v293
        %348 = vmatprep.subr.mxu0 0.0
        %349 = vmatpush2.msra.mxu0 0.0
        %350 = vmatprep.subr.mxu0 0.0
        %351 = vmatpush2.msra.mxu0 0.0
        %352 = vmatprep.subr.mxu0 0.0
        %353 = vmatpush2.msra.mxu0 0.0
        %354 = vmatprep.subr.mxu0 0.0
        %355 = vmatpush2.msra.mxu0 0.0
        %356 = vmatprep.subr.mxu0 0.0
        %357 = vmatpush2.msra.mxu0 0.0
        %358 = vmatprep.subr.mxu0 0.0
        %359 = vmatpush2.msra.mxu0 0.0
        %360 = vmatprep.subr.mxu0 0.0
        %361 = vmatpush2.msra.mxu0 0.0
        %362 = vmatprep.subr.mxu0 0.0
        %363 = vmatpush2.msra.mxu0 0.0
        %364 = vmatprep.subr.mxu0 0.0
        %365 = vmatpush2.msra.mxu0 0.0
        %366 = vmatprep.subr.mxu0 0.0
        %367 = vmatpush2.msra.mxu0 0.0
        %368 = vmatprep.subr.mxu0 0.0
        %369 = vmatpush2.msra.mxu0 0.0
        %370 = vmatprep.subr.mxu0 0.0
        %371 = vmatpush2.msra.mxu0 0.0
        %372 = vmatprep.subr.mxu0 0.0
        %373 = vmatpush2.msra.mxu0 0.0
        %374 = vmatprep.subr.mxu0 0.0
        %375 = vmatpush2.msra.mxu0 0.0
        %376 = vmatprep.subr.mxu0 0.0
        %377 = vmatpush2.msra.mxu0 0.0
        %378 = vmatprep.subr.mxu0 0.0
        %379 = vmatpush2.msra.mxu0 0.0
        %380 = vmatprep.mubr.f32.mxu0 0.0
        %381 = vmatmul.mubr.f32.gmra.mxu0 %v292
        %v382 = vpop.f32.mrf.mxu0
        %v383 = vadd.f32 %v314, %v382
        %v384 = vpop.f32.mrf.mxu0
        %385 = vdwg.mxu0
        %v386 = vadd.f32 %v255, %v383
        %387 = vst [vmem:[%s254] sm:$0xff] %v386
        %s388 = sand.u32 %s141, 1
        %s389 = scalar_lea.sflag [#allocation4], %s388
        %s390 = sand.u32 %s141, 1
        %s391 = smul.addr %s390, 8
        %s392 = scalar_lea.vmem [#allocation7], %s391
        // Predicated region
        $region49: #{tpu_custom_call.1} parent=39 // pred_check
          %p393 = pneg %p151
        $region50: #{tpu_custom_call.1} parent=39 // pred_check_branch
          %395 = sbr.rel (%p393) target = $region52
        $region51: #{tpu_custom_call.1} parent=39 // pred_region
          %s397 = ssub.s32 128, 128
          %398 = vsyncadd %s389, %s397
          %s399 = smul.addr %s23, 128
          %s400 = scalar_lea.hbm %s5, %s399
          %s402 = sshll.u32 %s392, 4
          %s403 = int_to_ptr.vmem [resolvable:$true] %s402
          %405 = dma.vmem_to_hbm [thread:$0]  %s403, 128, %s400, %s389
        $region52: #{tpu_custom_call.1} parent=39 // pred_fallthru
          _
      $region40: #{tpu_custom_call.1} parent=5 // pred_fallthru
        _
      %p406 = scmp.le.s32.totalorder 2, %s18
      // Predicated region
      $region53: #{tpu_custom_call.1} parent=5 // pred_check
        %p407 = pneg %p406
      $region54: #{tpu_custom_call.1} parent=5 // pred_check_branch
        %409 = sbr.rel (%p407) target = $region56
      $region55: #{tpu_custom_call.1} parent=5 // pred_region
        %s410 = ssub.s32 %s18, 2
        // Predicated region
        $region57: #{tpu_custom_call.1} parent=55 // pred_check
          %p411 = pneg %p157
        $region58: #{tpu_custom_call.1} parent=55 // pred_check_branch
          %413 = sbr.rel (%p411) target = $region60
        $region59: #{tpu_custom_call.1} parent=55 // pred_region
          %s414 = sand.u32 %s142, 1
          %s415 = scalar_lea.sflag [#allocation4], %s414
          %s416 = sand.u32 %s142, 1
          %s417 = smul.addr %s416, 8
          %s418 = scalar_lea.vmem [#allocation7], %s417
          %419 = dma.done %s415, 128
        $region60: #{tpu_custom_call.1} parent=55 // pred_fallthru
          _
      $region56: #{tpu_custom_call.1} parent=5 // pred_fallthru
        _
    $region6: #{tpu_custom_call.1} parent=1 // loop_footer
      %s22 = sadd.s32 1, %s18
    $region7: #{tpu_custom_call.1} parent=1 // loop_footer_branch
      %17 = sbr.rel target = $region3
    $region8: #{tpu_custom_call.1} parent=1 // loop_exit
      _
    %420 = vsyncpa [#allocation3], 1
    %s421 = scalar_lea.sflag [#allocation3], 1
    %422 = vsyncpa %s421, 1
    %423 = vsyncpa [#allocation6], 1
    %424 = vsyncpa [#allocation4], 1
    %s425 = scalar_lea.sflag [#allocation4], 1
    %426 = vsyncpa %s425, 1

</llo_original>
